<compile_context>
chip_gen: v7x
topology: tpu7x:2x2x1
jax: 0.10.0
libtpu: 0.0.40
codegen_flags: <defaults>
</compile_context>

<pallas_src>
import functools

import jax
import jax.numpy as jnp
from jax.experimental import pallas as pl
from jax.experimental.pallas import tpu as pltpu


_LANE = 128
_FAST_PATH_BYTES = 4 * 1024 * 1024      # below this, XLA's fused transpose wins
_TILE_BYTES_TARGET = 4 * 1024 * 1024    # ~roofline plateau for tile size


def _permute_kernel(x_ref, o_ref):
    # x_ref: (TC, TL) input tile; o_ref: (TL, TC) output tile.
    # 2-D VMEM tile transpose -> XLU vxpose, overlapped with the HBM DMAs.
    o_ref[...] = jnp.transpose(x_ref[...], (1, 0))


def _round_up(v: int, m: int) -> int:
    return ((v + m - 1) // m) * m


def _vmem_limits():
    """Per-generation VMEM working-set budget and scoped-VMEM limit (bytes)."""
    try:
        cap = int(pltpu.get_tpu_info().vmem_capacity_bytes)
    except Exception:  # pragma: no cover - conservative default (v7x)
        cap = 64 * 1024 * 1024
    # Working-set budget for the pipelined tiles (in + out, double-buffered,
    # plus compiler-internal scratch head-room).
    ws_budget = min((cap * 3) // 4, 100 * 1024 * 1024)   # v7x ~48 MiB, v6e ~100 MiB
    # Scoped-VMEM limit handed to Mosaic: generous but below physical.
    vmem_cap = min((cap * 7) // 8, 112 * 1024 * 1024)    # v7x ~56 MiB, v6e ~112 MiB
    return ws_budget, vmem_cap


def _choose_tile(extent: int, cap_elems: int):
    """Pick a tile length along one axis.

    Returns (tile, padded_extent).  Preference order:
      1. the full extent, if it fits under the cap (full-extent blocks are
         exempt from the (8, 128) divisibility rule);
      2. the largest multiple of 128 <= cap that divides `extent` exactly
         (no padding, no extra HBM traffic);
      3. otherwise a large lane-dense tile, padding `extent` up to a multiple
         of it (robustness fallback for awkward huge shapes — never OOMs VMEM).
    """
    cap_elems = max(int(cap_elems), _LANE)
    if extent <= cap_elems:
        return extent, extent
    cap128 = max((cap_elems // _LANE) * _LANE, _LANE)
    if extent % _LANE == 0:
        t = cap128
        while t >= _LANE:
            if extent % t == 0:
                return t, extent
            t -= _LANE
    t = min(cap128, 2048)
    return t, _round_up(extent, t)


def _pallas_transpose_call(xin, TC, TL, grid, in_map, out_map, out_shape,
                           vmem_limit_bytes):
    Bp, Cp, Lp = xin.shape
    itemsize = jnp.dtype(xin.dtype).itemsize
    return pl.pallas_call(
        _permute_kernel,
        out_shape=jax.ShapeDtypeStruct(out_shape, xin.dtype),
        grid_spec=pltpu.PrefetchScalarGridSpec(
            num_scalar_prefetch=0,
            grid=grid,
            in_specs=[pl.BlockSpec((pl.Squeezed(), TC, TL), in_map)],
            out_specs=pl.BlockSpec((pl.Squeezed(), TL, TC), out_map),
        ),
        compiler_params=pltpu.CompilerParams(
            dimension_semantics=("parallel",) * len(grid),
            vmem_limit_bytes=int(vmem_limit_bytes),
        ),
        cost_estimate=pl.CostEstimate(
            flops=0,
            transcendentals=0,
            bytes_accessed=2 * Bp * Cp * Lp * itemsize,
        ),
    )(xin)


@functools.partial(jax.jit, static_argnames=("force_pallas",))
def permute_021(x: jax.Array, *, force_pallas: bool = False) -> jax.Array:
    """Equivalent of torch `x.permute(0, 2, 1)` for a (B, C, L) array."""
    assert x.ndim == 3, "permute module expects a rank-3 (B, C, L) input"
    B, C, L = x.shape
    itemsize = jnp.dtype(x.dtype).itemsize
    total_bytes = B * C * L * itemsize

    # Fast path: for small/medium inputs the pallas_call launch + per-grid-step
    # overhead dominates the ~HBM-roofline work; XLA's native transpose wins.
    if not force_pallas and total_bytes <= _FAST_PATH_BYTES:
        return jnp.transpose(x, (0, 2, 1))

    ws_budget, vmem_cap = _vmem_limits()
    # in + out tiles are each double-buffered; keep head-room for internal
    # scratch.  Beyond ~4 MiB per tile there is no measured roofline gain, so
    # cap there even when VMEM would allow more.
    tile_budget = min(ws_budget // 5, _TILE_BYTES_TARGET)

    row_bytes = C * itemsize

    if row_bytes * _LANE <= tile_budget:
        # ---- Full-C output slabs (preferred) --------------------------------
        # Output block (TL, C): fully contiguous lane-dense HBM write.
        # Input block (C, TL): strided read with long TL-element rows.
        max_tl = tile_budget // row_bytes
        TL, Lp = _choose_tile(L, max_tl)
        TC, Cp = C, C

        xin = x
        if Lp != L:
            xin = jnp.pad(x, ((0, 0), (0, 0), (0, Lp - L)))

        nL = Lp // TL
        # Put the longer parallel axis first so the megacore split (v7x: 2 TCs)
        # lands on an axis with extent >= 2.
        if nL >= B:
            grid = (nL, B)
            in_map = lambda li, b: (b, 0, li)
            out_map = lambda li, b: (b, li, 0)
        else:
            grid = (B, nL)
            in_map = lambda b, li: (b, 0, li)
            out_map = lambda b, li: (b, li, 0)
    else:
        # ---- 2-D tiled fallback (very large C) ------------------------------
        max_elems = max(tile_budget // itemsize, _LANE * _LANE)
        side = max(int(max_elems ** 0.5), _LANE)
        TC, Cp = _choose_tile(C, side)
        TL, Lp = _choose_tile(L, max(max_elems // max(TC, 1), _LANE))

        xin = x
        if Cp != C or Lp != L:
            xin = jnp.pad(x, ((0, 0), (0, Cp - C), (0, Lp - L)))

        nC, nL = Cp // TC, Lp // TL
        # ci innermost: output tile base addresses advance by TC*itemsize each
        # step, keeping the write stream the more sequential one.
        grid = (B, nL, nC)
        in_map = lambda b, li, ci: (b, ci, li)
        out_map = lambda b, li, ci: (b, li, ci)

    tile_bytes = TC * TL * itemsize
    vmem_limit_bytes = min(max(32 * 1024 * 1024, 6 * tile_bytes), vmem_cap)

    out = _pallas_transpose_call(
        xin, TC, TL, grid, in_map, out_map, (B, Lp, Cp), vmem_limit_bytes)

    if Lp != L or Cp != C:
        out = out[:, :L, :C]
    return out


class Permute:
    """Drop-in equivalent of the PyTorch `permute` module."""

    def __call__(self, x: jax.Array) -> jax.Array:
        return permute_021(x)


if __name__ == "__main__":
    key = jax.random.PRNGKey(0)
    k1, k2, k3, k4 = jax.random.split(key, 4)

    # Small shape matching the module's (batch, channels, length) convention.
    B, C, L = 2, 8, 128
    x1 = jax.random.normal(k1, (B, C, L), dtype=jnp.float32)
    ref1 = jnp.transpose(x1, (0, 2, 1))
    out1 = jax.block_until_ready(permute_021(x1, force_pallas=True))
    assert out1.shape == (B, L, C)
    assert jnp.array_equal(out1, ref1)

    # Default path for tiny inputs (XLA-native fast path, identical semantics).
    out1_fast = jax.block_until_ready(permute_021(x1))
    assert jnp.array_equal(out1_fast, ref1)

    # Larger lane-dense shape: full-C contiguous-output path with TL = 384.
    B2, C2, L2 = 2, 256, 384
    x2 = jax.random.normal(k2, (B2, C2, L2), dtype=jnp.float32)
    out2 = jax.block_until_ready(permute_021(x2, force_pallas=True))
    assert out2.shape == (B2, L2, C2)
    assert jnp.array_equal(out2, jnp.transpose(x2, (0, 2, 1)))

    # Awkward, non-128-divisible shape (full-extent blocks are exempt from the
    # (8,128) rule) — still bit-exact.
    B3, C3, L3 = 2, 7, 50
    x3 = jax.random.normal(k3, (B3, C3, L3), dtype=jnp.float32)
    out3 = jax.block_until_ready(permute_021(x3, force_pallas=True))
    assert jnp.array_equal(out3, jnp.transpose(x3, (0, 2, 1)))

    # Narrow-dtype check (bf16 tiles pack along sublanes).
    B4, C4, L4 = 2, 16, 256
    x4 = jax.random.normal(k4, (B4, C4, L4), dtype=jnp.bfloat16)
    out4 = jax.block_until_ready(permute_021(x4, force_pallas=True))
    assert jnp.array_equal(out4, jnp.transpose(x4, (0, 2, 1)))

    print("KERNEL_OK")
</pallas_src>

<mosaic_0001>
module attributes {stable_mosaic.version = 11 : i64} {
  func.func @_permute_kernel(%arg0: i32, %arg1: i32, %arg2: memref<1x8x128xf32, #tpu.memory_space<vmem>>, %arg3: memref<1x128x8xf32, #tpu.memory_space<vmem>>) attributes {dimension_semantics = [#tpu.dimension_semantics<parallel>, #tpu.dimension_semantics<parallel>], iteration_bounds = array<i64: 2, 1>, scalar_prefetch = 0 : i64, scratch_operands = 0 : i64, tpu.core_type = #tpu.core_type<tc>, window_params = [{transform_indices = @transform_0, window_bounds = array<i64: 1, 8, 128>}, {transform_indices = @transform_1, window_bounds = array<i64: 1, 128, 8>}]} {
    %c0 = arith.constant 0 : index
    %c0_0 = arith.constant 0 : index
    %c0_1 = arith.constant 0 : index
    %0 = vector.load %arg2[%c0, %c0_0, %c0_1] : memref<1x8x128xf32, #tpu.memory_space<vmem>>, vector<1x8x128xf32>
    %1 = vector.shape_cast %0 : vector<1x8x128xf32> to vector<8x128xf32>
    %2 = tpu.transpose %1, [1, 0] : vector<8x128xf32> -> vector<128x8xf32>
    %c0_2 = arith.constant 0 : index
    %c0_3 = arith.constant 0 : index
    %c0_4 = arith.constant 0 : index
    %3 = vector.load %arg3[%c0_2, %c0_3, %c0_4] : memref<1x128x8xf32, #tpu.memory_space<vmem>>, vector<1x128x8xf32>
    %4 = vector.shape_cast %3 : vector<1x128x8xf32> to vector<128x8xf32>
    %5 = vector.shape_cast %2 : vector<128x8xf32> to vector<1x128x8xf32>
    tpu.vector_store %arg3[%c0_2, %c0_3, %c0_4], %5 {strides = array<i32>} : memref<1x128x8xf32, #tpu.memory_space<vmem>>, vector<1x128x8xf32>,
    return
  }
  func.func @transform_0(%arg0: i32, %arg1: i32) -> (i32, i32, i32) {
    %c0_i32 = arith.constant 0 : i32
    %c0_i32_0 = arith.constant 0 : i32
    return %arg0, %c0_i32, %arg1 : i32, i32, i32
  }
  func.func @transform_1(%arg0: i32, %arg1: i32) -> (i32, i32, i32) {
    %c0_i32 = arith.constant 0 : i32
    %c0_i32_0 = arith.constant 0 : i32
    return %arg0, %arg1, %c0_i32 : i32, i32, i32
  }
}

</mosaic_0001>

<llo_original>
// kernel: permute_021.1
$region0: #{permute_021.1}
  #allocation0 [shape = 'u32[]', space=smem, size = 0x4, offset = 0x4, fixed_abs, tag = 'smem constant byte address 0x4 - core index']
  #allocation1 [shape = 'u32[144,128]{1,0:T(1,128)}', space=vmem, size = 0x12000, scoped, tag = 'internal scratch']
  %s0 = inlined_call_operand.hbm [shape: f32[2,8,128], index: 0, kind: input, shape index: {}]
  %s1 = inlined_call_operand.vmem [shape: f32[2,128,8], index: 1, kind: output, shape index: {}]
  %s2 = sld [smem:[#allocation0]]
  $region41: #{permute_021.1} parent=0
    _
  %s4 = ssub.s32 1, %s2
  %s5 = scalar_select 0, %s4, %s2
  $region1: #{permute_021.1} parent=0
    #allocation2 [shape = 'u8[8192]{0}', space=vmem, size = 0x2000, scoped, tag = 'input window, operand 0']
    #allocation3 [shape = 's32[2]{0}', space=sflag, size = 0x8, scoped, tag = 'scoped memory for permute_021.1']
    %6 = vsyncpa [#allocation3], 0
    %s7 = scalar_lea.sflag [#allocation3], 1
    %8 = vsyncpa %s7, 0
    loop: start=0, step=1, limit=4
    $region2: #{permute_021.1} parent=1 // loop_pre_header
      _
    $region3: #{permute_021.1} parent=1 // loop_header
      %s10 = sphi 0, %s14
      %p11 = scmp.ge.s32.totalorder %s10, 4
      %s17 = sphi 0, %s29
      %s18 = sphi 0, %s25
      %s19 = sphi 0, %s17
      %s20 = sphi 0, %s18
      %s21 = sphi 0, %s19
      %s22 = sphi 0, %s20
      %s34 = sphi 0, %s36
      %s37 = sphi 0, %s34
      %s38 = sphi 0, %s37
      %s54 = sphi 0, %s38
      %s62 = sphi 0, %s64
      %s65 = sphi 0, %s62
      %s66 = sphi 0, %s65
      %s82 = sphi 0, %s66
    $region4: #{permute_021.1} parent=1 // loop_header_branch
      %13 = sbr.rel (%p11) target = $region8
    $region5: #{permute_021.1} parent=1 // loop_body
      %s15 = ssub.s32 %s10, 1
      %s16 = ssub.s32 %s10, 2
      %s23 = sadd.s32 1, %s18
      %p24 = scmp.ge.s32.totalorder %s23, 1
      %s25 = scalar_select %p24, 0, %s23
      %s26 = sadd.s32 1, %s17
      %s27 = scalar_select %p24, %s26, %s17
      %p28 = scmp.ge.s32.totalorder %s27, 2
      %s29 = scalar_select %p28, 0, %s27
      %s30 = ssub.s32 %s17, %s29
      %s31 = ssub.s32 %s18, %s25
      %s32 = sor.u32 %s30, %s31
      %p33 = scmp.eq.s32.totalorder %s32, 0
      %s35 = sadd.s32 %s34, 1
      %s36 = scalar_select %p33, %s34, %s35
      %p39 = pneg %p33
      %p40 = scmp.eq.s32.totalorder %s10, 1
      %p41 = por %p39, %p40
      %p42 = scmp.ne.s32.totalorder %s34, %s37
      %p43 = scmp.eq.s32.totalorder %s10, 0
      %p44 = por %p42, %p43
      %p45 = scmp.ne.s32.totalorder %s34, %s37
      %p46 = scmp.eq.s32.totalorder %s15, 1
      %p47 = por %p45, %p46
      %p48 = scmp.ne.s32.totalorder %s37, %s38
      %p49 = scmp.eq.s32.totalorder %s15, 0
      %p50 = por %p48, %p49
      %p51 = scmp.ne.s32.totalorder %s37, %s38
      %p52 = scmp.eq.s32.totalorder %s16, 1
      %p53 = por %p51, %p52
      %p55 = scmp.ne.s32.totalorder %s38, %s54
      %p56 = scmp.eq.s32.totalorder %s16, 0
      %p57 = por %p55, %p56
      %s58 = ssub.s32 %s17, %s29
      %s59 = ssub.s32 %s18, %s25
      %s60 = sor.u32 %s58, %s59
      %p61 = scmp.eq.s32.totalorder %s60, 0
      %s63 = sadd.s32 %s62, 1
      %s64 = scalar_select %p61, %s62, %s63
      %p67 = pneg %p61
      %p68 = scmp.eq.s32.totalorder %s10, 1
      %p69 = por %p67, %p68
      %p70 = scmp.ne.s32.totalorder %s62, %s65
      %p71 = scmp.eq.s32.totalorder %s10, 0
      %p72 = por %p70, %p71
      %p73 = scmp.ne.s32.totalorder %s62, %s65
      %p74 = scmp.eq.s32.totalorder %s15, 1
      %p75 = por %p73, %p74
      %p76 = scmp.ne.s32.totalorder %s65, %s66
      %p77 = scmp.eq.s32.totalorder %s15, 0
      %p78 = por %p76, %p77
      %p79 = scmp.ne.s32.totalorder %s65, %s66
      %p80 = scmp.eq.s32.totalorder %s16, 1
      %p81 = por %p79, %p80
      %p83 = scmp.ne.s32.totalorder %s66, %s82
      %p84 = scmp.eq.s32.totalorder %s16, 0
      %p85 = por %p83, %p84
      %p86 = scmp.le.s32.totalorder 1, %s10
      %p87 = scmp.lt.s32.totalorder %s10, 3
      %p88 = pnand %p86, %p87
      %p89 = pneg %p88
      // Predicated region
      $region9: #{permute_021.1} parent=5 // pred_check
        _
      $region10: #{permute_021.1} parent=5 // pred_check_branch
        %91 = sbr.rel (%p88) target = $region12
      $region11: #{permute_021.1} parent=5 // pred_region
        %s92 = ssub.s32 %s10, 1
      $region12: #{permute_021.1} parent=5 // pred_fallthru
        _
      %p93 = scmp.lt.s32.totalorder %s10, 2
      // Predicated region
      $region13: #{permute_021.1} parent=5 // pred_check
        %p94 = pneg %p93
      $region14: #{permute_021.1} parent=5 // pred_check_branch
        %96 = sbr.rel (%p94) target = $region16
      $region15: #{permute_021.1} parent=5 // pred_region
        // Predicated region
        $region17: #{permute_021.1} parent=15 // pred_check
          %p97 = pneg %p44
        $region18: #{permute_021.1} parent=15 // pred_check_branch
          %99 = sbr.rel (%p97) target = $region20
        $region19: #{permute_021.1} parent=15 // pred_region
          %s100 = sand.u32 %s34, 1
          %s101 = scalar_lea.sflag [#allocation3], %s100
          %s102 = sand.u32 %s34, 1
          %s103 = smul.addr %s102, 8
          %s104 = scalar_lea.vmem [#allocation2], %s103
          %s106 = ssub.s32 128, 128
          %107 = vsyncadd %s101, %s106
          %s108 = sadd.s32 %s18, %s17
          %s109 = smul.addr %s108, 128
          %s110 = scalar_lea.hbm %s0, %s109
          %s112 = sshll.u32 %s104, 4
          %s113 = int_to_ptr.vmem [resolvable:$true] %s112
          %115 = dma.hbm_to_vmem [thread:$0]  %s110, 128, %s113, %s101
        $region20: #{permute_021.1} parent=15 // pred_fallthru
          _
      $region16: #{permute_021.1} parent=5 // pred_fallthru
        _
      %p116 = scmp.le.s32.totalorder 1, %s10
      %p117 = scmp.lt.s32.totalorder %s10, 3
      %p118 = pnand %p116, %p117
      %p119 = pneg %p118
      // Predicated region
      $region21: #{permute_021.1} parent=5 // pred_check
        _
      $region22: #{permute_021.1} parent=5 // pred_check_branch
        %121 = sbr.rel (%p118) target = $region24
      $region23: #{permute_021.1} parent=5 // pred_region
        %s122 = ssub.s32 %s10, 1
        %s123 = sand.u32 %s37, 1
        %s124 = scalar_lea.sflag [#allocation3], %s123
        %s125 = sand.u32 %s37, 1
        %s126 = smul.addr %s125, 8
        %s127 = scalar_lea.vmem [#allocation2], %s126
        // Predicated region
        $region25: #{permute_021.1} parent=23 // pred_check
          %p128 = pneg %p50
        $region26: #{permute_021.1} parent=23 // pred_check_branch
          %130 = sbr.rel (%p128) target = $region28
        $region27: #{permute_021.1} parent=23 // pred_region
          %131 = dma.done %s124, 128
        $region28: #{permute_021.1} parent=23 // pred_fallthru
          _
        %s132 = sand.u32 %s37, 1
        %s133 = scalar_lea.sflag [#allocation3], %s132
        %s134 = sand.u32 %s37, 1
        %s135 = smul.addr %s134, 8
        %s136 = scalar_lea.vmem [#allocation2], %s135
        %p137 = pneg %p50
        %p138 = pneg %p47
        %p139 = pneg %p78
        %p140 = pneg %p75
        %s141 = smul.u32 16, %s20
        %p142 = scmp.lt.s32.totalorder %s19, 1
        %s143 = scalar_select %p142, %s19, 1
        %p144 = scmp.lt.s32.totalorder %s141, 15
        %s145 = scalar_select %p144, %s141, 15
        %s146 = smul.addr %s143, 16
        %s147 = sadd.s32 %s145, %s146
        %s148 = smul.addr %s147, 8
        %s149 = scalar_lea.vmem %s1, %s148
        %s150 = smul.u32 16, %s20
        %p151 = scmp.lt.s32.totalorder %s19, 1
        %s152 = scalar_select %p151, %s19, 1
        %p153 = scmp.lt.s32.totalorder %s150, 15
        %s154 = scalar_select %p153, %s150, 15
        %s155 = smul.addr %s152, 16
        %s156 = sadd.s32 %s154, %s155
        %s157 = smul.addr %s156, 8
        %s158 = scalar_lea.vmem %s1, %s157
        %s159 = smul.u32 16, %s20
        %v160 = vld [vmem:[%s127] sm:$0xff]
        %161 = vxpose.xlu0.b32.start [1/16] %v160, 128
        %162 = vxpose.xlu0.b32.cont [2/16] 0.0, 128
        %163 = vxpose.xlu0.b32.cont [3/16] 0.0, 128
        %164 = vxpose.xlu0.b32.cont [4/16] 0.0, 128
        %165 = vxpose.xlu0.b32.cont [5/16] 0.0, 128
        %166 = vxpose.xlu0.b32.cont [6/16] 0.0, 128
        %167 = vxpose.xlu0.b32.cont [7/16] 0.0, 128
        %168 = vxpose.xlu0.b32.cont [8/16] 0.0, 128
        %169 = vxpose.xlu0.b32.cont [9/16] 0.0, 128
        %170 = vxpose.xlu0.b32.cont [10/16] 0.0, 128
        %171 = vxpose.xlu0.b32.cont [11/16] 0.0, 128
        %172 = vxpose.xlu0.b32.cont [12/16] 0.0, 128
        %173 = vxpose.xlu0.b32.cont [13/16] 0.0, 128
        %174 = vxpose.xlu0.b32.cont [14/16] 0.0, 128
        %175 = vxpose.xlu0.b32.cont [15/16] 0.0, 128
        %176 = vxpose.xlu0.b32.end [16/16] 0.0, 128
        %v177 = vpop.trf.xlu0
        %v178 = vpop.trf.xlu0
        %v179 = vpop.trf.xlu0
        %v180 = vpop.trf.xlu0
        %v181 = vpop.trf.xlu0
        %v182 = vpop.trf.xlu0
        %v183 = vpop.trf.xlu0
        %v184 = vpop.trf.xlu0
        %v185 = vpop.trf.xlu0
        %v186 = vpop.trf.xlu0
        %v187 = vpop.trf.xlu0
        %v188 = vpop.trf.xlu0
        %v189 = vpop.trf.xlu0
        %v190 = vpop.trf.xlu0
        %v191 = vpop.trf.xlu0
        %v192 = vpop.trf.xlu0
        %vm193 = vcmask 64512
        %194 = vst.msk [vmem:[%s158] sm:$0xff] %vm193, %v177
        %195 = vst.msk [vmem:[%s158 + $0x8] sm:$0xff] %vm193, %v178
        %196 = vst.msk [vmem:[%s158 + $0x10] sm:$0xff] %vm193, %v179
        %197 = vst.msk [vmem:[%s158 + $0x18] sm:$0xff] %vm193, %v180
        %198 = vst.msk [vmem:[%s158 + $0x20] sm:$0xff] %vm193, %v181
        %199 = vst.msk [vmem:[%s158 + $0x28] sm:$0xff] %vm193, %v182
        %200 = vst.msk [vmem:[%s158 + $0x30] sm:$0xff] %vm193, %v183
        %201 = vst.msk [vmem:[%s158 + $0x38] sm:$0xff] %vm193, %v184
        %202 = vst.msk [vmem:[%s158 + $0x40] sm:$0xff] %vm193, %v185
        %203 = vst.msk [vmem:[%s158 + $0x48] sm:$0xff] %vm193, %v186
        %204 = vst.msk [vmem:[%s158 + $0x50] sm:$0xff] %vm193, %v187
        %205 = vst.msk [vmem:[%s158 + $0x58] sm:$0xff] %vm193, %v188
        %206 = vst.msk [vmem:[%s158 + $0x60] sm:$0xff] %vm193, %v189
        %207 = vst.msk [vmem:[%s158 + $0x68] sm:$0xff] %vm193, %v190
        %208 = vst.msk [vmem:[%s158 + $0x70] sm:$0xff] %vm193, %v191
        %209 = vst.msk [vmem:[%s158 + $0x78] sm:$0xff] %vm193, %v192
        %s210 = smul.u32 16, %s20
        %p211 = scmp.lt.s32.totalorder %s19, 1
        %s212 = scalar_select %p211, %s19, 1
        %p213 = scmp.lt.s32.totalorder %s210, 15
        %s214 = scalar_select %p213, %s210, 15
        %s215 = smul.addr %s212, 16
        %s216 = sadd.s32 %s214, %s215
        %s217 = smul.addr %s216, 8
        %s218 = scalar_lea.vmem %s1, %s217
        // Predicated region
        $region29: #{permute_021.1} parent=23 // pred_check
          %p219 = pneg %p75
        $region30: #{permute_021.1} parent=23 // pred_check_branch
          %221 = sbr.rel (%p219) target = $region32
        $region31: #{permute_021.1} parent=23 // pred_region
          %s222 = smul.u32 16, %s20
        $region32: #{permute_021.1} parent=23 // pred_fallthru
          _
      $region24: #{permute_021.1} parent=5 // pred_fallthru
        _
      %p223 = scmp.le.s32.totalorder 2, %s10
      // Predicated region
      $region33: #{permute_021.1} parent=5 // pred_check
        %p224 = pneg %p223
      $region34: #{permute_021.1} parent=5 // pred_check_branch
        %226 = sbr.rel (%p224) target = $region36
      $region35: #{permute_021.1} parent=5 // pred_region
        %s227 = ssub.s32 %s10, 2
        // Predicated region
        $region37: #{permute_021.1} parent=35 // pred_check
          %p228 = pneg %p81
        $region38: #{permute_021.1} parent=35 // pred_check_branch
          %230 = sbr.rel (%p228) target = $region40
        $region39: #{permute_021.1} parent=35 // pred_region
          %s231 = smul.u32 16, %s22
          %p232 = scmp.lt.s32.totalorder %s21, 1
          %s233 = scalar_select %p232, %s21, 1
          %p234 = scmp.lt.s32.totalorder %s231, 15
          %s235 = scalar_select %p234, %s231, 15
          %s236 = smul.addr %s233, 16
          %s237 = sadd.s32 %s235, %s236
          %s238 = smul.addr %s237, 8
          %s239 = scalar_lea.vmem %s1, %s238
        $region40: #{permute_021.1} parent=35 // pred_fallthru
          _
      $region36: #{permute_021.1} parent=5 // pred_fallthru
        _
    $region6: #{permute_021.1} parent=1 // loop_footer
      %s14 = sadd.s32 1, %s10
    $region7: #{permute_021.1} parent=1 // loop_footer_branch
      %9 = sbr.rel target = $region3
    $region8: #{permute_021.1} parent=1 // loop_exit
      _
    %240 = vsyncpa [#allocation3], 1
    %s241 = scalar_lea.sflag [#allocation3], 1
    %242 = vsyncpa %s241, 1

</llo_original>
